<compile_context>
chip_gen: v7x
topology: tpu7x:2x2x1
jax: 0.10.0
libtpu: 0.0.40
codegen_flags: <defaults>
</compile_context>

<pallas_src>
import jax
import jax.numpy as jnp
from jax.experimental import pallas as pl
from jax.experimental.pallas import tpu as pltpu

_SUBLANE = 8          # vreg sublane height
_LANE = 128           # vreg lane width
_LANE_N = 256         # MXU-facing (N) dims padded to 256 (v6e/v7x column util)


# ---------------------------------------------------------------------------
# helpers
# ---------------------------------------------------------------------------
def _round_up(n, m):
    return ((n + m - 1) // m) * m


def _cdiv(a, b):
    return -(-a // b)


def _chip_vmem_bytes():
    try:
        return int(pltpu.get_tpu_info().vmem_capacity_bytes)
    except Exception:
        return 64 * 1024 * 1024  # conservative fallback (v7x per-TC VMEM)


def _pad2d(a, rows, cols):
    pr, pc = rows - a.shape[0], cols - a.shape[1]
    if pr == 0 and pc == 0:
        return a
    return jnp.pad(a, ((0, pr), (0, pc)))


def _batch_tiling(B, cap_m):
    """Pick (block_m, padded_B) so padding is tight and the grid has >=2 tiles
    when there is enough work (keeps both v7x TensorCores busy)."""
    B8 = _round_up(B, _SUBLANE)
    cap_m = max(_SUBLANE, (int(cap_m) // _SUBLANE) * _SUBLANE)
    num = _cdiv(B8, cap_m)
    if num == 1 and B8 >= 2 * _SUBLANE:
        num = 2
    block_m = _round_up(_cdiv(B8, num), _SUBLANE)
    return block_m, num * block_m


def _pick_hidden_tile(H_p, desired):
    """Largest lane-aligned hidden tile <= desired that divides H_p exactly."""
    desired = max(_LANE, min(int(desired), H_p))
    nk = _cdiv(H_p, desired)
    while H_p % nk != 0 or (H_p // nk) % _LANE != 0:
        nk += 1
    return H_p // nk, nk


# ---------------------------------------------------------------------------
# kernels
# ---------------------------------------------------------------------------
def _ffn_kernel_resident(x_ref, w1_ref, b1_ref, w2_ref, b2_ref, o_ref):
    # fc1 on the MXU with f32 accumulation; x is cast in-kernel (hides under MXU).
    x = x_ref[...].astype(w1_ref.dtype)
    h = jnp.dot(x, w1_ref[...], preferred_element_type=jnp.float32)
    h = jnp.maximum(h + b1_ref[...], 0.0)                     # bias + ReLU (VPU)
    y = jnp.dot(h.astype(w2_ref.dtype), w2_ref[...],
                preferred_element_type=jnp.float32)
    o_ref[...] = (y + b2_ref[...]).astype(o_ref.dtype)


def _ffn_kernel_htiled(x_ref, w1_ref, b1_ref, w2_ref, b2_ref, o_ref, acc_ref):
    k = pl.program_id(1)

    @pl.when(k == 0)
    def _():
        acc_ref[...] = jnp.zeros_like(acc_ref)

    x = x_ref[...].astype(w1_ref.dtype)
    h = jnp.dot(x, w1_ref[...], preferred_element_type=jnp.float32)
    h = jnp.maximum(h + b1_ref[...], 0.0)                     # per-hidden-tile ReLU
    acc_ref[...] += jnp.dot(h.astype(w2_ref.dtype), w2_ref[...],
                            preferred_element_type=jnp.float32)

    @pl.when(k == pl.num_programs(1) - 1)
    def _():
        o_ref[...] = (acc_ref[...] + b2_ref[...]).astype(o_ref.dtype)


# ---------------------------------------------------------------------------
# wrappers
# ---------------------------------------------------------------------------
def prepare_ffn_params(w1, b1, w2, b2, *, compute_dtype=jnp.bfloat16):
    """Pad + cast the weights once (call outside the hot path and reuse)."""
    In, H = w1.shape
    H2, Out = w2.shape
    assert H == H2 and b1.shape == (H,) and b2.shape == (Out,)
    In_p = _round_up(In, _LANE)
    H_p = _round_up(H, _LANE_N)
    Out_p = _round_up(Out, _LANE_N)
    w1p = _pad2d(w1.astype(compute_dtype), In_p, H_p)
    w2p = _pad2d(w2.astype(compute_dtype), H_p, Out_p)
    # Biases stay f32: they are added to the f32 accumulator.
    b1p = _pad2d(b1.astype(jnp.float32).reshape(1, H), 1, H_p)
    b2p = _pad2d(b2.astype(jnp.float32).reshape(1, Out), 1, Out_p)
    return {"w1": w1p, "b1": b1p, "w2": w2p, "b2": b2p, "dims": (In, H, Out)}


def feedforward_prepared(x, params, *, block_m=None, hidden_tile=None):
    In, H, Out = params["dims"]
    w1p, b1p, w2p, b2p = params["w1"], params["b1"], params["w2"], params["b2"]
    In_p, H_p = w1p.shape
    Out_p = w2p.shape[1]

    B, In_x = x.shape
    assert In_x == In, "x feature dim does not match fc1 input size"

    out_dtype = x.dtype
    x_bytes = jnp.dtype(x.dtype).itemsize
    out_bytes = jnp.dtype(out_dtype).itemsize
    cd_bytes = jnp.dtype(w1p.dtype).itemsize

    vmem_cap = _chip_vmem_bytes()
    budget = int(0.80 * vmem_cap)          # leave headroom for compiler scratch

    # ------ resident-weights path feasibility ------------------------------
    weight_bytes = (In_p * H_p + H_p * Out_p) * cd_bytes + (H_p + Out_p) * 4
    row_bytes = (2 * In_p * x_bytes            # x tiles (double-buffered)
                 + 2 * Out_p * out_bytes       # out tiles (double-buffered)
                 + H_p * 4                     # f32 intermediate h
                 + (In_p + H_p) * cd_bytes)    # in-kernel cast temporaries
    use_resident = (hidden_tile is None
                    and weight_bytes + _SUBLANE * row_bytes <= budget)

    flops = 2 * H_p * (In_p + Out_p)           # per padded batch row

    if use_resident:
        cap_m = block_m if block_m is not None else 512
        cap_m = min(cap_m, 1024,
                    max(_SUBLANE, (budget - weight_bytes) // row_bytes))
        bm, B_pad = _batch_tiling(B, cap_m)
        xp = _pad2d(x, B_pad, In_p)

        est = weight_bytes + bm * row_bytes
        vmem_limit = min(int(0.9 * vmem_cap),
                         max(int(1.5 * est), 32 * 1024 * 1024))
        cost = pl.CostEstimate(
            flops=int(B_pad * flops), transcendentals=0,
            bytes_accessed=int(B_pad * In_p * x_bytes
                               + B_pad * Out_p * out_bytes + weight_bytes))

        def run(single_buffer_weights):
            mode = ({"pipeline_mode": pl.Buffered(1)}
                    if single_buffer_weights else {})
            return pl.pallas_call(
                _ffn_kernel_resident,
                out_shape=jax.ShapeDtypeStruct((B_pad, Out_p), out_dtype),
                grid=(B_pad // bm,),
                in_specs=[
                    pl.BlockSpec((bm, In_p), lambda i: (i, 0)),        # streamed
                    pl.BlockSpec((In_p, H_p), lambda i: (0, 0), **mode),  # resident
                    pl.BlockSpec((1, H_p), lambda i: (0, 0), **mode),
                    pl.BlockSpec((H_p, Out_p), lambda i: (0, 0), **mode),
                    pl.BlockSpec((1, Out_p), lambda i: (0, 0), **mode),
                ],
                out_specs=pl.BlockSpec((bm, Out_p), lambda i: (i, 0)),
                compiler_params=pltpu.CompilerParams(
                    dimension_semantics=("parallel",),
                    vmem_limit_bytes=int(vmem_limit)),
                cost_estimate=cost,
            )(xp, w1p, b1p, w2p, b2p)

        try:
            out_p = run(True)      # single-buffered resident weights
        except Exception:
            out_p = run(False)     # fallback: default double-buffering
        return out_p[:B, :Out]

    # ------ hidden-dimension-tiled path (v7x / transformer-scale H) --------
    def _fixed(bm):
        return (2 * bm * In_p * x_bytes + 2 * bm * Out_p * out_bytes
                + bm * Out_p * 4          # f32 accumulator scratch
                + Out_p * 4               # resident b2
                + bm * In_p * cd_bytes)   # cast temporary

    def _per_h(bm):
        return (2 * (In_p + Out_p) * cd_bytes   # streamed W1/W2 blocks (x2 bufs)
                + 8                             # b1 slice
                + bm * (4 + cd_bytes))          # f32 h tile + its bf16 cast

    bm, B_pad = _batch_tiling(B, block_m if block_m is not None else 256)
    while _fixed(bm) + _LANE * _per_h(bm) > budget and bm > 4 * _SUBLANE:
        bm, B_pad = _batch_tiling(B, max(_SUBLANE, bm // 2))

    avail = budget - _fixed(bm)
    if hidden_tile is not None:
        th_desired = hidden_tile
    else:
        th_desired = max(_LANE, min(2048, avail // _per_h(bm)))
    tile_h, nk = _pick_hidden_tile(H_p, th_desired)

    xp = _pad2d(x, B_pad, In_p)
    est = _fixed(bm) + tile_h * _per_h(bm)
    vmem_limit = min(int(0.9 * vmem_cap),
                     max(int(1.5 * est), 32 * 1024 * 1024))
    cost = pl.CostEstimate(
        flops=int(B_pad * flops), transcendentals=0,
        bytes_accessed=int(B_pad * In_p * x_bytes + B_pad * Out_p * out_bytes
                           + (B_pad // bm) * weight_bytes))

    def run(single_buffer_b2):
        mode = {"pipeline_mode": pl.Buffered(1)} if single_buffer_b2 else {}
        return pl.pallas_call(
            _ffn_kernel_htiled,
            out_shape=jax.ShapeDtypeStruct((B_pad, Out_p), out_dtype),
            grid=(B_pad // bm, nk),
            in_specs=[
                pl.BlockSpec((bm, In_p), lambda i, k: (i, 0)),
                pl.BlockSpec((In_p, tile_h), lambda i, k: (0, k)),   # W1 col-block
                pl.BlockSpec((1, tile_h), lambda i, k: (0, k)),      # b1 slice
                pl.BlockSpec((tile_h, Out_p), lambda i, k: (k, 0)),  # W2 row-block
                pl.BlockSpec((1, Out_p), lambda i, k: (0, 0), **mode),
            ],
            out_specs=pl.BlockSpec((bm, Out_p), lambda i, k: (i, 0)),
            scratch_shapes=[pltpu.VMEM((bm, Out_p), jnp.float32)],
            compiler_params=pltpu.CompilerParams(
                dimension_semantics=("parallel", "arbitrary"),
                vmem_limit_bytes=int(vmem_limit)),
            cost_estimate=cost,
        )(xp, w1p, b1p, w2p, b2p)

    try:
        out_p = run(True)
    except Exception:
        out_p = run(False)
    return out_p[:B, :Out]


def feedforward(x, w1, b1, w2, b2, *, compute_dtype=jnp.bfloat16,
                block_m=None, hidden_tile=None):
    """x: [B, in], w1: [in, hidden], b1: [hidden], w2: [hidden, out], b2: [out]."""
    params = prepare_ffn_params(w1, b1, w2, b2, compute_dtype=compute_dtype)
    return feedforward_prepared(x, params, block_m=block_m,
                                hidden_tile=hidden_tile)


def init_linear_params(key, in_features, out_features, dtype=jnp.float32):
    # Mimic torch nn.Linear default init: U(-1/sqrt(in), 1/sqrt(in)).
    # Stored as [in, out] (transposed vs PyTorch's [out, in]) so the kernel
    # computes x @ W directly.
    kw, kb = jax.random.split(key)
    bound = 1.0 / (in_features ** 0.5)
    w = jax.random.uniform(kw, (in_features, out_features), dtype,
                           minval=-bound, maxval=bound)
    b = jax.random.uniform(kb, (out_features,), dtype,
                           minval=-bound, maxval=bound)
    return w, b


if __name__ == "__main__":
    key = jax.random.PRNGKey(0)
    kx, k1, k2, kx2, k3, k4 = jax.random.split(key, 6)

    # --- Test 1: small shapes -> resident-weights path ----------------------
    batch, input_size, hidden_size, output_size = 8, 32, 64, 16
    x = jax.random.normal(kx, (batch, input_size), jnp.float32)
    w1, b1 = init_linear_params(k1, input_size, hidden_size)
    w2, b2 = init_linear_params(k2, hidden_size, output_size)

    out = jax.block_until_ready(feedforward(x, w1, b1, w2, b2))
    assert out.shape == (batch, output_size)

    # Reference 1: bf16-operand / f32-accumulate (kernel semantics).
    xb, w1b, w2b = (a.astype(jnp.bfloat16) for a in (x, w1, w2))
    h_ref = jnp.maximum(
        jnp.dot(xb, w1b, preferred_element_type=jnp.float32) + b1, 0.0)
    ref_bf16 = jnp.dot(h_ref.astype(jnp.bfloat16), w2b,
                       preferred_element_type=jnp.float32) + b2
    assert jnp.allclose(out, ref_bf16, atol=1e-2, rtol=1e-2), (
        float(jnp.max(jnp.abs(out - ref_bf16))))

    # Reference 2: f32 semantics of the PyTorch module (looser tolerance).
    ref_f32 = jnp.maximum(x @ w1 + b1, 0.0) @ w2 + b2
    assert jnp.allclose(out, ref_f32, atol=5e-2, rtol=5e-2), (
        float(jnp.max(jnp.abs(out - ref_f32))))

    # --- Test 2: force the hidden-tiled accumulator path --------------------
    batch2, in2, hid2, out2 = 24, 128, 512, 96
    x2 = jax.random.normal(kx2, (batch2, in2), jnp.float32)
    w1c, b1c = init_linear_params(k3, in2, hid2)
    w2c, b2c = init_linear_params(k4, hid2, out2)
    o2 = jax.block_until_ready(
        feedforward(x2, w1c, b1c, w2c, b2c, block_m=16, hidden_tile=256))
    assert o2.shape == (batch2, out2)
    ref2 = jnp.maximum(x2 @ w1c + b1c, 0.0) @ w2c + b2c
    assert jnp.allclose(o2, ref2, atol=5e-2, rtol=5e-2), (
        float(jnp.max(jnp.abs(o2 - ref2))))

    print("KERNEL_OK")
</pallas_src>

<mosaic_0001>
module attributes {stable_mosaic.version = 11 : i64} {
  func.func @_ffn_kernel_resident(%arg0: i32, %arg1: memref<8x128xf32, #tpu.memory_space<vmem>>, %arg2: memref<128x256xbf16, #tpu.memory_space<vmem>>, %arg3: memref<1x256xf32, #tpu.memory_space<vmem>>, %arg4: memref<256x256xbf16, #tpu.memory_space<vmem>>, %arg5: memref<1x256xf32, #tpu.memory_space<vmem>>, %arg6: memref<8x256xf32, #tpu.memory_space<vmem>>) attributes {dimension_semantics = [#tpu.dimension_semantics<parallel>], iteration_bounds = array<i64: 1>, scalar_prefetch = 0 : i64, scratch_operands = 0 : i64, tpu.core_type = #tpu.core_type<tc>, window_params = [{transform_indices = @transform_0, window_bounds = array<i64: 8, 128>}, {pipeline_mode = #tpu.pipeline_mode<synchronous>, transform_indices = @transform_1, window_bounds = array<i64: 128, 256>}, {pipeline_mode = #tpu.pipeline_mode<synchronous>, transform_indices = @transform_2, window_bounds = array<i64: 1, 256>}, {pipeline_mode = #tpu.pipeline_mode<synchronous>, transform_indices = @transform_3, window_bounds = array<i64: 256, 256>}, {pipeline_mode = #tpu.pipeline_mode<synchronous>, transform_indices = @transform_4, window_bounds = array<i64: 1, 256>}, {transform_indices = @transform_5, window_bounds = array<i64: 8, 256>}]} {
    %c0 = arith.constant 0 : index
    %c0_0 = arith.constant 0 : index
    %0 = vector.load %arg1[%c0, %c0_0] : memref<8x128xf32, #tpu.memory_space<vmem>>, vector<8x128xf32>
    %1 = arith.truncf %0 : vector<8x128xf32> to vector<8x128xbf16>
    %c0_1 = arith.constant 0 : index
    %c0_2 = arith.constant 0 : index
    %2 = vector.load %arg2[%c0_1, %c0_2] : memref<128x256xbf16, #tpu.memory_space<vmem>>, vector<128x256xbf16>
    %cst = arith.constant dense<0.000000e+00> : vector<8x256xf32>
    %3 = tpu.matmul %1, %2, %cst {dimension_numbers = #tpu.dot_dimension_numbers<[1], [0], [0], [1], [0, 0, 1, 1], [], []>} : vector<8x128xbf16>, vector<128x256xbf16>, vector<8x256xf32> -> vector<8x256xf32>
    %c0_3 = arith.constant 0 : index
    %c0_4 = arith.constant 0 : index
    %4 = vector.load %arg3[%c0_3, %c0_4] : memref<1x256xf32, #tpu.memory_space<vmem>>, vector<1x256xf32>
    %5 = vector.broadcast %4 : vector<1x256xf32> to vector<8x256xf32>
    %6 = arith.addf %3, %5 : vector<8x256xf32>
    %cst_5 = arith.constant 0.000000e+00 : f32
    %7 = vector.broadcast %cst_5 : f32 to vector<8x256xf32>
    %8 = arith.maximumf %6, %7 : vector<8x256xf32>
    %9 = arith.truncf %8 : vector<8x256xf32> to vector<8x256xbf16>
    %c0_6 = arith.constant 0 : index
    %c0_7 = arith.constant 0 : index
    %10 = vector.load %arg4[%c0_6, %c0_7] : memref<256x256xbf16, #tpu.memory_space<vmem>>, vector<256x256xbf16>
    %cst_8 = arith.constant dense<0.000000e+00> : vector<8x256xf32>
    %11 = tpu.matmul %9, %10, %cst_8 {dimension_numbers = #tpu.dot_dimension_numbers<[1], [0], [0], [1], [0, 0, 1, 1], [], []>} : vector<8x256xbf16>, vector<256x256xbf16>, vector<8x256xf32> -> vector<8x256xf32>
    %c0_9 = arith.constant 0 : index
    %c0_10 = arith.constant 0 : index
    %12 = vector.load %arg5[%c0_9, %c0_10] : memref<1x256xf32, #tpu.memory_space<vmem>>, vector<1x256xf32>
    %13 = vector.broadcast %12 : vector<1x256xf32> to vector<8x256xf32>
    %14 = arith.addf %11, %13 : vector<8x256xf32>
    %c0_11 = arith.constant 0 : index
    %c0_12 = arith.constant 0 : index
    %15 = vector.load %arg6[%c0_11, %c0_12] : memref<8x256xf32, #tpu.memory_space<vmem>>, vector<8x256xf32>
    tpu.vector_store %arg6[%c0_11, %c0_12], %14 {strides = array<i32>} : memref<8x256xf32, #tpu.memory_space<vmem>>, vector<8x256xf32>,
    return
  }
  func.func @transform_0(%arg0: i32) -> (i32, i32) {
    %c0_i32 = arith.constant 0 : i32
    %c0_i32_0 = arith.constant 0 : i32
    return %arg0, %c0_i32 : i32, i32
  }
  func.func @transform_1(%arg0: i32) -> (i32, i32) {
    %c0_i32 = arith.constant 0 : i32
    %c0_i32_0 = arith.constant 0 : i32
    %c0_i32_1 = arith.constant 0 : i32
    return %c0_i32, %c0_i32_0 : i32, i32
  }
  func.func @transform_2(%arg0: i32) -> (i32, i32) {
    %c0_i32 = arith.constant 0 : i32
    %c0_i32_0 = arith.constant 0 : i32
    %c0_i32_1 = arith.constant 0 : i32
    return %c0_i32, %c0_i32_0 : i32, i32
  }
  func.func @transform_3(%arg0: i32) -> (i32, i32) {
    %c0_i32 = arith.constant 0 : i32
    %c0_i32_0 = arith.constant 0 : i32
    %c0_i32_1 = arith.constant 0 : i32
    return %c0_i32, %c0_i32_0 : i32, i32
  }
  func.func @transform_4(%arg0: i32) -> (i32, i32) {
    %c0_i32 = arith.constant 0 : i32
    %c0_i32_0 = arith.constant 0 : i32
    %c0_i32_1 = arith.constant 0 : i32
    return %c0_i32, %c0_i32_0 : i32, i32
  }
  func.func @transform_5(%arg0: i32) -> (i32, i32) {
    %c0_i32 = arith.constant 0 : i32
    %c0_i32_0 = arith.constant 0 : i32
    return %arg0, %c0_i32 : i32, i32
  }
}

module attributes {stable_mosaic.version = 11 : i64} {
  func.func @_ffn_kernel_resident(%arg0: i32, %arg1: memref<8x128xf32, #tpu.memory_space<vmem>>, %arg2: memref<128x256xbf16, #tpu.memory_space<vmem>>, %arg3: memref<1x256xf32, #tpu.memory_space<vmem>>, %arg4: memref<256x256xbf16, #tpu.memory_space<vmem>>, %arg5: memref<1x256xf32, #tpu.memory_space<vmem>>, %arg6: memref<8x256xf32, #tpu.memory_space<vmem>>) attributes {dimension_semantics = [#tpu.dimension_semantics<parallel>], iteration_bounds = array<i64: 1>, scalar_prefetch = 0 : i64, scratch_operands = 0 : i64, tpu.core_type = #tpu.core_type<tc>, window_params = [{transform_indices = @transform_0, window_bounds = array<i64: 8, 128>}, {pipeline_mode = #tpu.pipeline_mode<synchronous>, transform_indices = @transform_1, window_bounds = array<i64: 128, 256>}, {pipeline_mode = #tpu.pipeline_mode<synchronous>, transform_indices = @transform_2, window_bounds = array<i64: 1, 256>}, {pipeline_mode = #tpu.pipeline_mode<synchronous>, transform_indices = @transform_3, window_bounds = array<i64: 256, 256>}, {pipeline_mode = #tpu.pipeline_mode<synchronous>, transform_indices = @transform_4, window_bounds = array<i64: 1, 256>}, {transform_indices = @transform_5, window_bounds = array<i64: 8, 256>}]} {
    %c0 = arith.constant 0 : index
    %c0_0 = arith.constant 0 : index
    %0 = vector.load %arg1[%c0, %c0_0] : memref<8x128xf32, #tpu.memory_space<vmem>>, vector<8x128xf32>
    %1 = arith.truncf %0 : vector<8x128xf32> to vector<8x128xbf16>
    %c0_1 = arith.constant 0 : index
    %c0_2 = arith.constant 0 : index
    %2 = vector.load %arg2[%c0_1, %c0_2] : memref<128x256xbf16, #tpu.memory_space<vmem>>, vector<128x256xbf16>
    %cst = arith.constant dense<0.000000e+00> : vector<8x256xf32>
    %3 = tpu.matmul %1, %2, %cst {dimension_numbers = #tpu.dot_dimension_numbers<[1], [0], [0], [1], [0, 0, 1, 1], [], []>} : vector<8x128xbf16>, vector<128x256xbf16>, vector<8x256xf32> -> vector<8x256xf32>
    %c0_3 = arith.constant 0 : index
    %c0_4 = arith.constant 0 : index
    %4 = vector.load %arg3[%c0_3, %c0_4] : memref<1x256xf32, #tpu.memory_space<vmem>>, vector<1x256xf32>
    %5 = vector.broadcast %4 : vector<1x256xf32> to vector<8x256xf32>
    %6 = arith.addf %3, %5 : vector<8x256xf32>
    %cst_5 = arith.constant 0.000000e+00 : f32
    %7 = vector.broadcast %cst_5 : f32 to vector<8x256xf32>
    %8 = arith.maximumf %6, %7 : vector<8x256xf32>
    %9 = arith.truncf %8 : vector<8x256xf32> to vector<8x256xbf16>
    %c0_6 = arith.constant 0 : index
    %c0_7 = arith.constant 0 : index
    %10 = vector.load %arg4[%c0_6, %c0_7] : memref<256x256xbf16, #tpu.memory_space<vmem>>, vector<256x256xbf16>
    %cst_8 = arith.constant dense<0.000000e+00> : vector<8x256xf32>
    %11 = tpu.matmul %9, %10, %cst_8 {dimension_numbers = #tpu.dot_dimension_numbers<[1], [0], [0], [1], [0, 0, 1, 1], [], []>} : vector<8x256xbf16>, vector<256x256xbf16>, vector<8x256xf32> -> vector<8x256xf32>
    %c0_9 = arith.constant 0 : index
    %c0_10 = arith.constant 0 : index
    %12 = vector.load %arg5[%c0_9, %c0_10] : memref<1x256xf32, #tpu.memory_space<vmem>>, vector<1x256xf32>
    %13 = vector.broadcast %12 : vector<1x256xf32> to vector<8x256xf32>
    %14 = arith.addf %11, %13 : vector<8x256xf32>
    %c0_11 = arith.constant 0 : index
    %c0_12 = arith.constant 0 : index
    %15 = vector.load %arg6[%c0_11, %c0_12] : memref<8x256xf32, #tpu.memory_space<vmem>>, vector<8x256xf32>
    tpu.vector_store %arg6[%c0_11, %c0_12], %14 {strides = array<i32>} : memref<8x256xf32, #tpu.memory_space<vmem>>, vector<8x256xf32>,
    return
  }
  func.func @transform_0(%arg0: i32) -> (i32, i32) {
    %c0_i32 = arith.constant 0 : i32
    %c0_i32_0 = arith.constant 0 : i32
    return %arg0, %c0_i32 : i32, i32
  }
  func.func @transform_1(%arg0: i32) -> (i32, i32) {
    %c0_i32 = arith.constant 0 : i32
    %c0_i32_0 = arith.constant 0 : i32
    %c0_i32_1 = arith.constant 0 : i32
    return %c0_i32, %c0_i32_0 : i32, i32
  }
  func.func @transform_2(%arg0: i32) -> (i32, i32) {
    %c0_i32 = arith.constant 0 : i32
    %c0_i32_0 = arith.constant 0 : i32
    %c0_i32_1 = arith.constant 0 : i32
    return %c0_i32, %c0_i32_0 : i32, i32
  }
  func.func @transform_3(%arg0: i32) -> (i32, i32) {
    %c0_i32 = arith.constant 0 : i32
    %c0_i32_0 = arith.constant 0 : i32
    %c0_i32_1 = arith.constant 0 : i32
    return %c0_i32, %c0_i32_0 : i32, i32
  }
  func.func @transform_4(%arg0: i32) -> (i32, i32) {
    %c0_i32 = arith.constant 0 : i32
    %c0_i32_0 = arith.constant 0 : i32
    %c0_i32_1 = arith.constant 0 : i32
    return %c0_i32, %c0_i32_0 : i32, i32
  }
  func.func @transform_5(%arg0: i32) -> (i32, i32) {
    %c0_i32 = arith.constant 0 : i32
    %c0_i32_0 = arith.constant 0 : i32
    return %arg0, %c0_i32 : i32, i32
  }
}

</mosaic_0001>

<llo_original>
// kernel: tpu_custom_call.1
$region0: #{tpu_custom_call.1}
  #allocation0 [shape = 'u32[]', space=smem, size = 0x4, offset = 0x4, fixed_abs, tag = 'smem constant byte address 0x4 - core index']
  #allocation1 [shape = 'u32[144,128]{1,0:T(1,128)}', space=vmem, size = 0x12000, scoped, tag = 'internal scratch']
  %s0 = inlined_call_operand.hbm [shape: f32[8,128], index: 0, kind: input, shape index: {}]
  %s1 = inlined_call_operand.hbm [shape: bf16[128,256], index: 1, kind: input, shape index: {}]
  %s2 = inlined_call_operand.vmem [shape: f32[1,256], index: 2, kind: input, shape index: {}]
  %s3 = inlined_call_operand.hbm [shape: bf16[256,256], index: 3, kind: input, shape index: {}]
  %s4 = inlined_call_operand.vmem [shape: f32[1,256], index: 4, kind: input, shape index: {}]
  %s5 = inlined_call_operand.hbm [shape: f32[8,256], index: 5, kind: output, shape index: {}]
  %s6 = sld [smem:[#allocation0]]
  $region42: #{tpu_custom_call.1} parent=0
    _
  %s8 = ssub.s32 1, %s6
  %s9 = scalar_select 0, %s8, %s6
  $region1: #{tpu_custom_call.1} parent=0
    #allocation2 [shape = 'u8[4096]{0}', space=vmem, size = 0x1000, scoped, tag = 'input window, operand 0, single buffered']
    #allocation3 [shape = 's32[1]{0}', space=sflag, size = 0x4, scoped, tag = 'scoped memory for tpu_custom_call.1']
    #allocation4 [shape = 's32[1]{0}', space=sflag, size = 0x4, scoped, tag = 'scoped memory for tpu_custom_call.1']
    #allocation5 [shape = 'u8[65536]{0}', space=vmem, size = 0x10000, scoped, tag = 'input window, operand 1, single buffered']
    #allocation6 [shape = 's32[1]{0}', space=sflag, size = 0x4, scoped, tag = 'scoped memory for tpu_custom_call.1']
    #allocation7 [shape = 'u8[131072]{0}', space=vmem, size = 0x20000, scoped, tag = 'input window, operand 3, single buffered']
    #allocation8 [shape = 'u8[8192]{0}', space=vmem, size = 0x2000, scoped, tag = 'output window, operand 0, single buffered']
    %10 = vsyncpa [#allocation3], 0
    %11 = vsyncpa [#allocation6], 0
    %12 = vsyncpa [#allocation4], 0
    // Predicated region
    $region2: #{tpu_custom_call.1} parent=1 // pred_check
      _
    $region3: #{tpu_custom_call.1} parent=1 // pred_check_branch
      %14 = sbr.rel (0) target = $region5
    $region4: #{tpu_custom_call.1} parent=1 // pred_region
      %s16 = ssub.s32 128, 128
      %17 = vsyncadd [#allocation3], %s16
      %s19 = sshll.u32 [#allocation2], 4
      %s20 = int_to_ptr.vmem [resolvable:$true] %s19
      %22 = dma.hbm_to_vmem [thread:$0]  %s0, 128, %s20, [#allocation3]
    $region5: #{tpu_custom_call.1} parent=1 // pred_fallthru
      _
    // Predicated region
    $region6: #{tpu_custom_call.1} parent=1 // pred_check
      _
    $region7: #{tpu_custom_call.1} parent=1 // pred_check_branch
      %24 = sbr.rel (0) target = $region9
    $region8: #{tpu_custom_call.1} parent=1 // pred_region
      %s26 = ssub.s32 2048, 2048
      %27 = vsyncadd [#allocation6], %s26
      %s28 = sshll.u32 [#allocation5], 4
      %s29 = int_to_ptr.vmem [resolvable:$true] %s28
      %34 = dma.hbm_to_vmem [thread:$0]  %s1, 2048, %s29, [#allocation6], 128, 128, 8
    $region9: #{tpu_custom_call.1} parent=1 // pred_fallthru
      _
    // Predicated region
    $region10: #{tpu_custom_call.1} parent=1 // pred_check
      _
    $region11: #{tpu_custom_call.1} parent=1 // pred_check_branch
      %36 = sbr.rel (0) target = $region13
    $region12: #{tpu_custom_call.1} parent=1 // pred_region
      _
    $region13: #{tpu_custom_call.1} parent=1 // pred_fallthru
      _
    // Predicated region
    $region14: #{tpu_custom_call.1} parent=1 // pred_check
      _
    $region15: #{tpu_custom_call.1} parent=1 // pred_check_branch
      %38 = sbr.rel (0) target = $region17
    $region16: #{tpu_custom_call.1} parent=1 // pred_region
      %s40 = ssub.s32 4096, 4096
      %41 = vsyncadd [#allocation6], %s40
      %s42 = sshll.u32 [#allocation7], 4
      %s43 = int_to_ptr.vmem [resolvable:$true] %s42
      %48 = dma.hbm_to_vmem [thread:$0]  %s3, 4096, %s43, [#allocation6], 128, 128, 8
    $region17: #{tpu_custom_call.1} parent=1 // pred_fallthru
      _
    // Predicated region
    $region18: #{tpu_custom_call.1} parent=1 // pred_check
      _
    $region19: #{tpu_custom_call.1} parent=1 // pred_check_branch
      %50 = sbr.rel (0) target = $region21
    $region20: #{tpu_custom_call.1} parent=1 // pred_region
      _
    $region21: #{tpu_custom_call.1} parent=1 // pred_fallthru
      _
    // Predicated region
    $region22: #{tpu_custom_call.1} parent=1 // pred_check
      _
    $region23: #{tpu_custom_call.1} parent=1 // pred_check_branch
      %52 = sbr.rel (0) target = $region25
    $region24: #{tpu_custom_call.1} parent=1 // pred_region
      %53 = dma.done [#allocation3], 128
    $region25: #{tpu_custom_call.1} parent=1 // pred_fallthru
      _
    // Predicated region
    $region26: #{tpu_custom_call.1} parent=1 // pred_check
      _
    $region27: #{tpu_custom_call.1} parent=1 // pred_check_branch
      %55 = sbr.rel (0) target = $region29
    $region28: #{tpu_custom_call.1} parent=1 // pred_region
      %56 = dma.done [#allocation6], 2048
    $region29: #{tpu_custom_call.1} parent=1 // pred_fallthru
      _
    // Predicated region
    $region30: #{tpu_custom_call.1} parent=1 // pred_check
      _
    $region31: #{tpu_custom_call.1} parent=1 // pred_check_branch
      %58 = sbr.rel (0) target = $region33
    $region32: #{tpu_custom_call.1} parent=1 // pred_region
      %59 = dma.done [#allocation6], 4096
    $region33: #{tpu_custom_call.1} parent=1 // pred_fallthru
      _
    %v61 = vld [vmem:[#allocation2] sm:$0xff]
    %v62 = vpack.c.bf16 %v61, %v61
    %v63 = vld [vmem:[#allocation5] sm:$0xff]
    %v64 = vld [vmem:[#allocation5 + $0x8] sm:$0xff]
    %v65 = vld [vmem:[#allocation5 + $0x10] sm:$0xff]
    %v66 = vld [vmem:[#allocation5 + $0x18] sm:$0xff]
    %v67 = vld [vmem:[#allocation5 + $0x20] sm:$0xff]
    %v68 = vld [vmem:[#allocation5 + $0x28] sm:$0xff]
    %v69 = vld [vmem:[#allocation5 + $0x30] sm:$0xff]
    %v70 = vld [vmem:[#allocation5 + $0x38] sm:$0xff]
    %v71 = vld [vmem:[#allocation5 + $0x40] sm:$0xff]
    %v72 = vld [vmem:[#allocation5 + $0x48] sm:$0xff]
    %v73 = vld [vmem:[#allocation5 + $0x50] sm:$0xff]
    %v74 = vld [vmem:[#allocation5 + $0x58] sm:$0xff]
    %v75 = vld [vmem:[#allocation5 + $0x60] sm:$0xff]
    %v76 = vld [vmem:[#allocation5 + $0x68] sm:$0xff]
    %v77 = vld [vmem:[#allocation5 + $0x70] sm:$0xff]
    %v78 = vld [vmem:[#allocation5 + $0x78] sm:$0xff]
    %v79 = vld [vmem:[%s2] sm:$0x3]
    %v81 = vlaneseq
    %v82 = vshrl.u32 %v81, 7
    %v83 = vsub.s32 0, %v82
    %v84 = vrot.slane %v79, %v83
    %v85 = vlaneseq
    %v86 = vshrl.u32 %v85, 7
    %v87 = vsub.s32 1, %v86
    %v88 = vrot.slane %v79, %v87
    %v107 = vunpack.c.l.b16 %v63
    %v108 = vunpack.c.h.b16 %v63
    %v109 = vunpack.c.l.b16 %v64
    %v110 = vunpack.c.h.b16 %v64
    %v111 = vunpack.c.l.b16 %v65
    %v112 = vunpack.c.h.b16 %v65
    %v113 = vunpack.c.l.b16 %v66
    %v114 = vunpack.c.h.b16 %v66
    %v115 = vunpack.c.l.b16 %v67
    %v116 = vunpack.c.h.b16 %v67
    %v117 = vunpack.c.l.b16 %v68
    %v118 = vunpack.c.h.b16 %v68
    %v119 = vunpack.c.l.b16 %v69
    %v120 = vunpack.c.h.b16 %v69
    %v121 = vunpack.c.l.b16 %v70
    %v122 = vunpack.c.h.b16 %v70
    %v123 = vunpack.c.l.b16 %v71
    %v124 = vunpack.c.h.b16 %v71
    %v125 = vunpack.c.l.b16 %v72
    %v126 = vunpack.c.h.b16 %v72
    %v127 = vunpack.c.l.b16 %v73
    %v128 = vunpack.c.h.b16 %v73
    %v129 = vunpack.c.l.b16 %v74
    %v130 = vunpack.c.h.b16 %v74
    %v131 = vunpack.c.l.b16 %v75
    %v132 = vunpack.c.h.b16 %v75
    %v133 = vunpack.c.l.b16 %v76
    %v134 = vunpack.c.h.b16 %v76
    %v135 = vunpack.c.l.b16 %v77
    %v136 = vunpack.c.h.b16 %v77
    %v137 = vunpack.c.l.b16 %v78
    %v138 = vunpack.c.h.b16 %v78
    %v139 = vpack.c.b16 %v109, %v107
    %v140 = vpack.c.b16 %v110, %v108
    %v141 = vpack.c.b16 %v113, %v111
    %v142 = vpack.c.b16 %v114, %v112
    %v143 = vpack.c.b16 %v117, %v115
    %v144 = vpack.c.b16 %v118, %v116
    %v145 = vpack.c.b16 %v121, %v119
    %v146 = vpack.c.b16 %v122, %v120
    %v147 = vpack.c.b16 %v125, %v123
    %v148 = vpack.c.b16 %v126, %v124
    %v149 = vpack.c.b16 %v129, %v127
    %v150 = vpack.c.b16 %v130, %v128
    %v151 = vpack.c.b16 %v133, %v131
    %v152 = vpack.c.b16 %v134, %v132
    %v153 = vpack.c.b16 %v137, %v135
    %v154 = vpack.c.b16 %v138, %v136
    %171 = vmatprep.subr.bf16.mxu0 %v140
    %172 = vmatpush1.bf16.msra.mxu0 %v139
    %173 = vmatprep.subr.bf16.mxu0 %v142
    %174 = vmatpush1.bf16.msra.mxu0 %v141
    %175 = vmatprep.subr.bf16.mxu0 %v144
    %176 = vmatpush1.bf16.msra.mxu0 %v143
    %177 = vmatprep.subr.bf16.mxu0 %v146
    %178 = vmatpush1.bf16.msra.mxu0 %v145
    %179 = vmatprep.subr.bf16.mxu0 %v148
    %180 = vmatpush1.bf16.msra.mxu0 %v147
    %181 = vmatprep.subr.bf16.mxu0 %v150
    %182 = vmatpush1.bf16.msra.mxu0 %v149
    %183 = vmatprep.subr.bf16.mxu0 %v152
    %184 = vmatpush1.bf16.msra.mxu0 %v151
    %185 = vmatprep.subr.bf16.mxu0 %v154
    %186 = vmatpush1.bf16.msra.mxu0 %v153
    %187 = vmatprep.subr.bf16.mxu0 0
    %188 = vmatpush1.bf16.msra.mxu0 0
    %189 = vmatprep.subr.bf16.mxu0 0
    %190 = vmatpush1.bf16.msra.mxu0 0
    %191 = vmatprep.subr.bf16.mxu0 0
    %192 = vmatpush1.bf16.msra.mxu0 0
    %193 = vmatprep.subr.bf16.mxu0 0
    %194 = vmatpush1.bf16.msra.mxu0 0
    %195 = vmatprep.subr.bf16.mxu0 0
    %196 = vmatpush1.bf16.msra.mxu0 0
    %197 = vmatprep.subr.bf16.mxu0 0
    %198 = vmatpush1.bf16.msra.mxu0 0
    %199 = vmatprep.subr.bf16.mxu0 0
    %200 = vmatpush1.bf16.msra.mxu0 0
    %201 = vmatprep.subr.bf16.mxu0 0
    %202 = vmatpush1.bf16.msra.mxu0 0
    %203 = vmatprep.mubr.bf16.mxu0 0
    %204 = vmatmul.mubr.bf16.gmra.mrb[0].mxu0 %v62
    %v205 = vpop.f32.mrb[0].mxu0
    %v206 = vadd.f32 %v84, %v205
    %v207 = vpop.f32.mrb[0].mxu0
    %v208 = vadd.f32 %v88, %v207
    %v209 = vpop.f32.mrb[0].mxu0
    %v210 = vpop.f32.mrb[0].mxu0
    %211 = vdwg.mxu0
    %v212 = vmax.f32 %v206, 0.0
    %v213 = vmax.f32 %v208, 0.0
    %v214 = vpack.c.bf16 %v212, %v212
    %v215 = vpack.c.bf16 %v213, %v213
    %v216 = vld [vmem:[#allocation7] sm:$0xff]
    %v217 = vld [vmem:[#allocation7 + $0x8] sm:$0xff]
    %v218 = vld [vmem:[#allocation7 + $0x10] sm:$0xff]
    %v219 = vld [vmem:[#allocation7 + $0x18] sm:$0xff]
    %v220 = vld [vmem:[#allocation7 + $0x20] sm:$0xff]
    %v221 = vld [vmem:[#allocation7 + $0x28] sm:$0xff]
    %v222 = vld [vmem:[#allocation7 + $0x30] sm:$0xff]
    %v223 = vld [vmem:[#allocation7 + $0x38] sm:$0xff]
    %v224 = vld [vmem:[#allocation7 + $0x40] sm:$0xff]
    %v225 = vld [vmem:[#allocation7 + $0x48] sm:$0xff]
    %v226 = vld [vmem:[#allocation7 + $0x50] sm:$0xff]
    %v227 = vld [vmem:[#allocation7 + $0x58] sm:$0xff]
    %v228 = vld [vmem:[#allocation7 + $0x60] sm:$0xff]
    %v229 = vld [vmem:[#allocation7 + $0x68] sm:$0xff]
    %v230 = vld [vmem:[#allocation7 + $0x70] sm:$0xff]
    %v231 = vld [vmem:[#allocation7 + $0x78] sm:$0xff]
    %v232 = vld [vmem:[#allocation7 + $0x80] sm:$0xff]
    %v233 = vld [vmem:[#allocation7 + $0x88] sm:$0xff]
    %v234 = vld [vmem:[#allocation7 + $0x90] sm:$0xff]
    %v235 = vld [vmem:[#allocation7 + $0x98] sm:$0xff]
    %v236 = vld [vmem:[#allocation7 + $0xa0] sm:$0xff]
    %v237 = vld [vmem:[#allocation7 + $0xa8] sm:$0xff]
    %v238 = vld [vmem:[#allocation7 + $0xb0] sm:$0xff]
    %v239 = vld [vmem:[#allocation7 + $0xb8] sm:$0xff]
    %v240 = vld [vmem:[#allocation7 + $0xc0] sm:$0xff]
    %v241 = vld [vmem:[#allocation7 + $0xc8] sm:$0xff]
    %v242 = vld [vmem:[#allocation7 + $0xd0] sm:$0xff]
    %v243 = vld [vmem:[#allocation7 + $0xd8] sm:$0xff]
    %v244 = vld [vmem:[#allocation7 + $0xe0] sm:$0xff]
    %v245 = vld [vmem:[#allocation7 + $0xe8] sm:$0xff]
    %v246 = vld [vmem:[#allocation7 + $0xf0] sm:$0xff]
    %v247 = vld [vmem:[#allocation7 + $0xf8] sm:$0xff]
    %v248 = vld [vmem:[%s4] sm:$0x3]
    %v250 = vlaneseq
    %v251 = vshrl.u32 %v250, 7
    %v252 = vsub.s32 0, %v251
    %v253 = vrot.slane %v248, %v252
    %v254 = vlaneseq
    %v255 = vshrl.u32 %v254, 7
    %v256 = vsub.s32 1, %v255
    %v257 = vrot.slane %v248, %v256
    %v292 = vunpack.c.l.b16 %v216
    %v293 = vunpack.c.h.b16 %v216
    %v294 = vunpack.c.l.b16 %v217
    %v295 = vunpack.c.h.b16 %v217
    %v296 = vunpack.c.l.b16 %v218
    %v297 = vunpack.c.h.b16 %v218
    %v298 = vunpack.c.l.b16 %v219
    %v299 = vunpack.c.h.b16 %v219
    %v300 = vunpack.c.l.b16 %v220
    %v301 = vunpack.c.h.b16 %v220
    %v302 = vunpack.c.l.b16 %v221
    %v303 = vunpack.c.h.b16 %v221
    %v304 = vunpack.c.l.b16 %v222
    %v305 = vunpack.c.h.b16 %v222
    %v306 = vunpack.c.l.b16 %v223
    %v307 = vunpack.c.h.b16 %v223
    %v308 = vunpack.c.l.b16 %v224
    %v309 = vunpack.c.h.b16 %v224
    %v310 = vunpack.c.l.b16 %v225
    %v311 = vunpack.c.h.b16 %v225
    %v312 = vunpack.c.l.b16 %v226
    %v313 = vunpack.c.h.b16 %v226
    %v314 = vunpack.c.l.b16 %v227
    %v315 = vunpack.c.h.b16 %v227
    %v316 = vunpack.c.l.b16 %v228
    %v317 = vunpack.c.h.b16 %v228
    %v318 = vunpack.c.l.b16 %v229
    %v319 = vunpack.c.h.b16 %v229
    %v320 = vunpack.c.l.b16 %v230
    %v321 = vunpack.c.h.b16 %v230
    %v322 = vunpack.c.l.b16 %v231
    %v323 = vunpack.c.h.b16 %v231
    %v324 = vunpack.c.l.b16 %v232
    %v325 = vunpack.c.h.b16 %v232
    %v326 = vunpack.c.l.b16 %v233
    %v327 = vunpack.c.h.b16 %v233
    %v328 = vunpack.c.l.b16 %v234
    %v329 = vunpack.c.h.b16 %v234
    %v330 = vunpack.c.l.b16 %v235
    %v331 = vunpack.c.h.b16 %v235
    %v332 = vunpack.c.l.b16 %v236
    %v333 = vunpack.c.h.b16 %v236
    %v334 = vunpack.c.l.b16 %v237
    %v335 = vunpack.c.h.b16 %v237
    %v336 = vunpack.c.l.b16 %v238
    %v337 = vunpack.c.h.b16 %v238
    %v338 = vunpack.c.l.b16 %v239
    %v339 = vunpack.c.h.b16 %v239
    %v340 = vunpack.c.l.b16 %v240
    %v341 = vunpack.c.h.b16 %v240
    %v342 = vunpack.c.l.b16 %v241
    %v343 = vunpack.c.h.b16 %v241
    %v344 = vunpack.c.l.b16 %v242
    %v345 = vunpack.c.h.b16 %v242
    %v346 = vunpack.c.l.b16 %v243
    %v347 = vunpack.c.h.b16 %v243
    %v348 = vunpack.c.l.b16 %v244
    %v349 = vunpack.c.h.b16 %v244
    %v350 = vunpack.c.l.b16 %v245
    %v351 = vunpack.c.h.b16 %v245
    %v352 = vunpack.c.l.b16 %v246
    %v353 = vunpack.c.h.b16 %v246
    %v354 = vunpack.c.l.b16 %v247
    %v355 = vunpack.c.h.b16 %v247
    %v356 = vpack.c.b16 %v294, %v292
    %v357 = vpack.c.b16 %v295, %v293
    %v358 = vpack.c.b16 %v298, %v296
    %v359 = vpack.c.b16 %v299, %v297
    %v360 = vpack.c.b16 %v302, %v300
    %v361 = vpack.c.b16 %v303, %v301
    %v362 = vpack.c.b16 %v306, %v304
    %v363 = vpack.c.b16 %v307, %v305
    %v364 = vpack.c.b16 %v310, %v308
    %v365 = vpack.c.b16 %v311, %v309
    %v366 = vpack.c.b16 %v314, %v312
    %v367 = vpack.c.b16 %v315, %v313
    %v368 = vpack.c.b16 %v318, %v316
    %v369 = vpack.c.b16 %v319, %v317
    %v370 = vpack.c.b16 %v322, %v320
    %v371 = vpack.c.b16 %v323, %v321
    %v372 = vpack.c.b16 %v326, %v324
    %v373 = vpack.c.b16 %v327, %v325
    %v374 = vpack.c.b16 %v330, %v328
    %v375 = vpack.c.b16 %v331, %v329
    %v376 = vpack.c.b16 %v334, %v332
    %v377 = vpack.c.b16 %v335, %v333
    %v378 = vpack.c.b16 %v338, %v336
    %v379 = vpack.c.b16 %v339, %v337
    %v380 = vpack.c.b16 %v342, %v340
    %v381 = vpack.c.b16 %v343, %v341
    %v382 = vpack.c.b16 %v346, %v344
    %v383 = vpack.c.b16 %v347, %v345
    %v384 = vpack.c.b16 %v350, %v348
    %v385 = vpack.c.b16 %v351, %v349
    %v386 = vpack.c.b16 %v354, %v352
    %v387 = vpack.c.b16 %v355, %v353
    %420 = vmatprep.subr.bf16.mxu0 %v357
    %421 = vmatpush1.bf16.msra.mxu0 %v356
    %422 = vmatprep.subr.bf16.mxu0 %v359
    %423 = vmatpush1.bf16.msra.mxu0 %v358
    %424 = vmatprep.subr.bf16.mxu0 %v361
    %425 = vmatpush1.bf16.msra.mxu0 %v360
    %426 = vmatprep.subr.bf16.mxu0 %v363
    %427 = vmatpush1.bf16.msra.mxu0 %v362
    %428 = vmatprep.subr.bf16.mxu0 %v365
    %429 = vmatpush1.bf16.msra.mxu0 %v364
    %430 = vmatprep.subr.bf16.mxu0 %v367
    %431 = vmatpush1.bf16.msra.mxu0 %v366
    %432 = vmatprep.subr.bf16.mxu0 %v369
    %433 = vmatpush1.bf16.msra.mxu0 %v368
    %434 = vmatprep.subr.bf16.mxu0 %v371
    %435 = vmatpush1.bf16.msra.mxu0 %v370
    %436 = vmatprep.subr.bf16.mxu0 %v373
    %437 = vmatpush1.bf16.msra.mxu0 %v372
    %438 = vmatprep.subr.bf16.mxu0 %v375
    %439 = vmatpush1.bf16.msra.mxu0 %v374
    %440 = vmatprep.subr.bf16.mxu0 %v377
    %441 = vmatpush1.bf16.msra.mxu0 %v376
    %442 = vmatprep.subr.bf16.mxu0 %v379
    %443 = vmatpush1.bf16.msra.mxu0 %v378
    %444 = vmatprep.subr.bf16.mxu0 %v381
    %445 = vmatpush1.bf16.msra.mxu0 %v380
    %446 = vmatprep.subr.bf16.mxu0 %v383
    %447 = vmatpush1.bf16.msra.mxu0 %v382
    %448 = vmatprep.subr.bf16.mxu0 %v385
    %449 = vmatpush1.bf16.msra.mxu0 %v384
    %450 = vmatprep.subr.bf16.mxu0 %v387
    %451 = vmatpush1.bf16.msra.mxu0 %v386
    %452 = vmatprep.mubr.bf16.mxu0 %v215
    %453 = vmatmul.mubr.bf16.gmra.mrb[0].mxu0 %v214
    %v454 = vpop.f32.mrb[0].mxu0
    %v455 = vadd.f32 %v253, %v454
    %v456 = vpop.f32.mrb[0].mxu0
    %v457 = vadd.f32 %v257, %v456
    %v458 = vpop.f32.mrb[0].mxu0
    %v459 = vpop.f32.mrb[0].mxu0
    %460 = vdwg.mxu0
    %461 = vst [vmem:[#allocation8] sm:$0xff] %v455
    %462 = vst [vmem:[#allocation8 + $0x8] sm:$0xff] %v457
    // Predicated region
    $region34: #{tpu_custom_call.1} parent=1 // pred_check
      _
    $region35: #{tpu_custom_call.1} parent=1 // pred_check_branch
      %464 = sbr.rel (0) target = $region37
    $region36: #{tpu_custom_call.1} parent=1 // pred_region
      %s466 = ssub.s32 256, 256
      %467 = vsyncadd [#allocation4], %s466
      %s469 = sshll.u32 [#allocation8], 4
      %s470 = int_to_ptr.vmem [resolvable:$true] %s469
      %472 = dma.vmem_to_hbm [thread:$0]  %s470, 256, %s5, [#allocation4]
    $region37: #{tpu_custom_call.1} parent=1 // pred_fallthru
      _
    // Predicated region
    $region38: #{tpu_custom_call.1} parent=1 // pred_check
      _
    $region39: #{tpu_custom_call.1} parent=1 // pred_check_branch
      %474 = sbr.rel (0) target = $region41
    $region40: #{tpu_custom_call.1} parent=1 // pred_region
      %475 = dma.done [#allocation4], 256
    $region41: #{tpu_custom_call.1} parent=1 // pred_fallthru
      _
    %476 = vsyncpa [#allocation3], 1
    %477 = vsyncpa [#allocation6], 1
    %478 = vsyncpa [#allocation4], 1

// kernel: tpu_custom_call.1
$region0: #{tpu_custom_call.1}
  #allocation0 [shape = 'u32[]', space=smem, size = 0x4, offset = 0x4, fixed_abs, tag = 'smem constant byte address 0x4 - core index']
  #allocation1 [shape = 'u32[144,128]{1,0:T(1,128)}', space=vmem, size = 0x12000, scoped, tag = 'internal scratch']
  %s0 = inlined_call_operand.hbm [shape: f32[8,128], index: 0, kind: input, shape index: {}]
  %s1 = inlined_call_operand.hbm [shape: bf16[128,256], index: 1, kind: input, shape index: {}]
  %s2 = inlined_call_operand.vmem [shape: f32[1,256], index: 2, kind: input, shape index: {}]
  %s3 = inlined_call_operand.hbm [shape: bf16[256,256], index: 3, kind: input, shape index: {}]
  %s4 = inlined_call_operand.vmem [shape: f32[1,256], index: 4, kind: input, shape index: {}]
  %s5 = inlined_call_operand.hbm [shape: f32[8,256], index: 5, kind: output, shape index: {}]
  %s6 = sld [smem:[#allocation0]]
  $region42: #{tpu_custom_call.1} parent=0
    _
  %s8 = ssub.s32 1, %s6
  %s9 = scalar_select 0, %s8, %s6
  $region1: #{tpu_custom_call.1} parent=0
    #allocation2 [shape = 'u8[4096]{0}', space=vmem, size = 0x1000, scoped, tag = 'input window, operand 0, single buffered']
    #allocation3 [shape = 's32[1]{0}', space=sflag, size = 0x4, scoped, tag = 'scoped memory for tpu_custom_call.1']
    #allocation4 [shape = 's32[1]{0}', space=sflag, size = 0x4, scoped, tag = 'scoped memory for tpu_custom_call.1']
    #allocation5 [shape = 'u8[65536]{0}', space=vmem, size = 0x10000, scoped, tag = 'input window, operand 1, single buffered']
    #allocation6 [shape = 's32[1]{0}', space=sflag, size = 0x4, scoped, tag = 'scoped memory for tpu_custom_call.1']
    #allocation7 [shape = 'u8[131072]{0}', space=vmem, size = 0x20000, scoped, tag = 'input window, operand 3, single buffered']
    #allocation8 [shape = 'u8[8192]{0}', space=vmem, size = 0x2000, scoped, tag = 'output window, operand 0, single buffered']
    %10 = vsyncpa [#allocation3], 0
    %11 = vsyncpa [#allocation6], 0
    %12 = vsyncpa [#allocation4], 0
    // Predicated region
    $region2: #{tpu_custom_call.1} parent=1 // pred_check
      _
    $region3: #{tpu_custom_call.1} parent=1 // pred_check_branch
      %14 = sbr.rel (0) target = $region5
    $region4: #{tpu_custom_call.1} parent=1 // pred_region
      %s16 = ssub.s32 128, 128
      %17 = vsyncadd [#allocation3], %s16
      %s19 = sshll.u32 [#allocation2], 4
      %s20 = int_to_ptr.vmem [resolvable:$true] %s19
      %22 = dma.hbm_to_vmem [thread:$0]  %s0, 128, %s20, [#allocation3]
    $region5: #{tpu_custom_call.1} parent=1 // pred_fallthru
      _
    // Predicated region
    $region6: #{tpu_custom_call.1} parent=1 // pred_check
      _
    $region7: #{tpu_custom_call.1} parent=1 // pred_check_branch
      %24 = sbr.rel (0) target = $region9
    $region8: #{tpu_custom_call.1} parent=1 // pred_region
      %s26 = ssub.s32 2048, 2048
      %27 = vsyncadd [#allocation6], %s26
      %s28 = sshll.u32 [#allocation5], 4
      %s29 = int_to_ptr.vmem [resolvable:$true] %s28
      %34 = dma.hbm_to_vmem [thread:$0]  %s1, 2048, %s29, [#allocation6], 128, 128, 8
    $region9: #{tpu_custom_call.1} parent=1 // pred_fallthru
      _
    // Predicated region
    $region10: #{tpu_custom_call.1} parent=1 // pred_check
      _
    $region11: #{tpu_custom_call.1} parent=1 // pred_check_branch
      %36 = sbr.rel (0) target = $region13
    $region12: #{tpu_custom_call.1} parent=1 // pred_region
      _
    $region13: #{tpu_custom_call.1} parent=1 // pred_fallthru
      _
    // Predicated region
    $region14: #{tpu_custom_call.1} parent=1 // pred_check
      _
    $region15: #{tpu_custom_call.1} parent=1 // pred_check_branch
      %38 = sbr.rel (0) target = $region17
    $region16: #{tpu_custom_call.1} parent=1 // pred_region
      %s40 = ssub.s32 4096, 4096
      %41 = vsyncadd [#allocation6], %s40
      %s42 = sshll.u32 [#allocation7], 4
      %s43 = int_to_ptr.vmem [resolvable:$true] %s42
      %48 = dma.hbm_to_vmem [thread:$0]  %s3, 4096, %s43, [#allocation6], 128, 128, 8
    $region17: #{tpu_custom_call.1} parent=1 // pred_fallthru
      _
    // Predicated region
    $region18: #{tpu_custom_call.1} parent=1 // pred_check
      _
    $region19: #{tpu_custom_call.1} parent=1 // pred_check_branch
      %50 = sbr.rel (0) target = $region21
    $region20: #{tpu_custom_call.1} parent=1 // pred_region
      _
    $region21: #{tpu_custom_call.1} parent=1 // pred_fallthru
      _
    // Predicated region
    $region22: #{tpu_custom_call.1} parent=1 // pred_check
      _
    $region23: #{tpu_custom_call.1} parent=1 // pred_check_branch
      %52 = sbr.rel (0) target = $region25
    $region24: #{tpu_custom_call.1} parent=1 // pred_region
      %53 = dma.done [#allocation3], 128
    $region25: #{tpu_custom_call.1} parent=1 // pred_fallthru
      _
    // Predicated region
    $region26: #{tpu_custom_call.1} parent=1 // pred_check
      _
    $region27: #{tpu_custom_call.1} parent=1 // pred_check_branch
      %55 = sbr.rel (0) target = $region29
    $region28: #{tpu_custom_call.1} parent=1 // pred_region
      %56 = dma.done [#allocation6], 2048
    $region29: #{tpu_custom_call.1} parent=1 // pred_fallthru
      _
    // Predicated region
    $region30: #{tpu_custom_call.1} parent=1 // pred_check
      _
    $region31: #{tpu_custom_call.1} parent=1 // pred_check_branch
      %58 = sbr.rel (0) target = $region33
    $region32: #{tpu_custom_call.1} parent=1 // pred_region
      %59 = dma.done [#allocation6], 4096
    $region33: #{tpu_custom_call.1} parent=1 // pred_fallthru
      _
    %v61 = vld [vmem:[#allocation2] sm:$0xff]
    %v62 = vpack.c.bf16 %v61, %v61
    %v63 = vld [vmem:[#allocation5] sm:$0xff]
    %v64 = vld [vmem:[#allocation5 + $0x8] sm:$0xff]
    %v65 = vld [vmem:[#allocation5 + $0x10] sm:$0xff]
    %v66 = vld [vmem:[#allocation5 + $0x18] sm:$0xff]
    %v67 = vld [vmem:[#allocation5 + $0x20] sm:$0xff]
    %v68 = vld [vmem:[#allocation5 + $0x28] sm:$0xff]
    %v69 = vld [vmem:[#allocation5 + $0x30] sm:$0xff]
    %v70 = vld [vmem:[#allocation5 + $0x38] sm:$0xff]
    %v71 = vld [vmem:[#allocation5 + $0x40] sm:$0xff]
    %v72 = vld [vmem:[#allocation5 + $0x48] sm:$0xff]
    %v73 = vld [vmem:[#allocation5 + $0x50] sm:$0xff]
    %v74 = vld [vmem:[#allocation5 + $0x58] sm:$0xff]
    %v75 = vld [vmem:[#allocation5 + $0x60] sm:$0xff]
    %v76 = vld [vmem:[#allocation5 + $0x68] sm:$0xff]
    %v77 = vld [vmem:[#allocation5 + $0x70] sm:$0xff]
    %v78 = vld [vmem:[#allocation5 + $0x78] sm:$0xff]
    %v79 = vld [vmem:[%s2] sm:$0x3]
    %v81 = vlaneseq
    %v82 = vshrl.u32 %v81, 7
    %v83 = vsub.s32 0, %v82
    %v84 = vrot.slane %v79, %v83
    %v85 = vlaneseq
    %v86 = vshrl.u32 %v85, 7
    %v87 = vsub.s32 1, %v86
    %v88 = vrot.slane %v79, %v87
    %v107 = vunpack.c.l.b16 %v63
    %v108 = vunpack.c.h.b16 %v63
    %v109 = vunpack.c.l.b16 %v64
    %v110 = vunpack.c.h.b16 %v64
    %v111 = vunpack.c.l.b16 %v65
    %v112 = vunpack.c.h.b16 %v65
    %v113 = vunpack.c.l.b16 %v66
    %v114 = vunpack.c.h.b16 %v66
    %v115 = vunpack.c.l.b16 %v67
    %v116 = vunpack.c.h.b16 %v67
    %v117 = vunpack.c.l.b16 %v68
    %v118 = vunpack.c.h.b16 %v68
    %v119 = vunpack.c.l.b16 %v69
    %v120 = vunpack.c.h.b16 %v69
    %v121 = vunpack.c.l.b16 %v70
    %v122 = vunpack.c.h.b16 %v70
    %v123 = vunpack.c.l.b16 %v71
    %v124 = vunpack.c.h.b16 %v71
    %v125 = vunpack.c.l.b16 %v72
    %v126 = vunpack.c.h.b16 %v72
    %v127 = vunpack.c.l.b16 %v73
    %v128 = vunpack.c.h.b16 %v73
    %v129 = vunpack.c.l.b16 %v74
    %v130 = vunpack.c.h.b16 %v74
    %v131 = vunpack.c.l.b16 %v75
    %v132 = vunpack.c.h.b16 %v75
    %v133 = vunpack.c.l.b16 %v76
    %v134 = vunpack.c.h.b16 %v76
    %v135 = vunpack.c.l.b16 %v77
    %v136 = vunpack.c.h.b16 %v77
    %v137 = vunpack.c.l.b16 %v78
    %v138 = vunpack.c.h.b16 %v78
    %v139 = vpack.c.b16 %v109, %v107
    %v140 = vpack.c.b16 %v110, %v108
    %v141 = vpack.c.b16 %v113, %v111
    %v142 = vpack.c.b16 %v114, %v112
    %v143 = vpack.c.b16 %v117, %v115
    %v144 = vpack.c.b16 %v118, %v116
    %v145 = vpack.c.b16 %v121, %v119
    %v146 = vpack.c.b16 %v122, %v120
    %v147 = vpack.c.b16 %v125, %v123
    %v148 = vpack.c.b16 %v126, %v124
    %v149 = vpack.c.b16 %v129, %v127
    %v150 = vpack.c.b16 %v130, %v128
    %v151 = vpack.c.b16 %v133, %v131
    %v152 = vpack.c.b16 %v134, %v132
    %v153 = vpack.c.b16 %v137, %v135
    %v154 = vpack.c.b16 %v138, %v136
    %171 = vmatprep.subr.bf16.mxu0 %v140
    %172 = vmatpush1.bf16.msra.mxu0 %v139
    %173 = vmatprep.subr.bf16.mxu0 %v142
    %174 = vmatpush1.bf16.msra.mxu0 %v141
    %175 = vmatprep.subr.bf16.mxu0 %v144
    %176 = vmatpush1.bf16.msra.mxu0 %v143
    %177 = vmatprep.subr.bf16.mxu0 %v146
    %178 = vmatpush1.bf16.msra.mxu0 %v145
    %179 = vmatprep.subr.bf16.mxu0 %v148
    %180 = vmatpush1.bf16.msra.mxu0 %v147
    %181 = vmatprep.subr.bf16.mxu0 %v150
    %182 = vmatpush1.bf16.msra.mxu0 %v149
    %183 = vmatprep.subr.bf16.mxu0 %v152
    %184 = vmatpush1.bf16.msra.mxu0 %v151
    %185 = vmatprep.subr.bf16.mxu0 %v154
    %186 = vmatpush1.bf16.msra.mxu0 %v153
    %187 = vmatprep.subr.bf16.mxu0 0
    %188 = vmatpush1.bf16.msra.mxu0 0
    %189 = vmatprep.subr.bf16.mxu0 0
    %190 = vmatpush1.bf16.msra.mxu0 0
    %191 = vmatprep.subr.bf16.mxu0 0
    %192 = vmatpush1.bf16.msra.mxu0 0
    %193 = vmatprep.subr.bf16.mxu0 0
    %194 = vmatpush1.bf16.msra.mxu0 0
    %195 = vmatprep.subr.bf16.mxu0 0
    %196 = vmatpush1.bf16.msra.mxu0 0
    %197 = vmatprep.subr.bf16.mxu0 0
    %198 = vmatpush1.bf16.msra.mxu0 0
    %199 = vmatprep.subr.bf16.mxu0 0
    %200 = vmatpush1.bf16.msra.mxu0 0
    %201 = vmatprep.subr.bf16.mxu0 0
    %202 = vmatpush1.bf16.msra.mxu0 0
    %203 = vmatprep.mubr.bf16.mxu0 0
    %204 = vmatmul.mubr.bf16.gmra.mrb[0].mxu0 %v62
    %v205 = vpop.f32.mrb[0].mxu0
    %v206 = vadd.f32 %v84, %v205
    %v207 = vpop.f32.mrb[0].mxu0
    %v208 = vadd.f32 %v88, %v207
    %v209 = vpop.f32.mrb[0].mxu0
    %v210 = vpop.f32.mrb[0].mxu0
    %211 = vdwg.mxu0
    %v212 = vmax.f32 %v206, 0.0
    %v213 = vmax.f32 %v208, 0.0
    %v214 = vpack.c.bf16 %v212, %v212
    %v215 = vpack.c.bf16 %v213, %v213
    %v216 = vld [vmem:[#allocation7] sm:$0xff]
    %v217 = vld [vmem:[#allocation7 + $0x8] sm:$0xff]
    %v218 = vld [vmem:[#allocation7 + $0x10] sm:$0xff]
    %v219 = vld [vmem:[#allocation7 + $0x18] sm:$0xff]
    %v220 = vld [vmem:[#allocation7 + $0x20] sm:$0xff]
    %v221 = vld [vmem:[#allocation7 + $0x28] sm:$0xff]
    %v222 = vld [vmem:[#allocation7 + $0x30] sm:$0xff]
    %v223 = vld [vmem:[#allocation7 + $0x38] sm:$0xff]
    %v224 = vld [vmem:[#allocation7 + $0x40] sm:$0xff]
    %v225 = vld [vmem:[#allocation7 + $0x48] sm:$0xff]
    %v226 = vld [vmem:[#allocation7 + $0x50] sm:$0xff]
    %v227 = vld [vmem:[#allocation7 + $0x58] sm:$0xff]
    %v228 = vld [vmem:[#allocation7 + $0x60] sm:$0xff]
    %v229 = vld [vmem:[#allocation7 + $0x68] sm:$0xff]
    %v230 = vld [vmem:[#allocation7 + $0x70] sm:$0xff]
    %v231 = vld [vmem:[#allocation7 + $0x78] sm:$0xff]
    %v232 = vld [vmem:[#allocation7 + $0x80] sm:$0xff]
    %v233 = vld [vmem:[#allocation7 + $0x88] sm:$0xff]
    %v234 = vld [vmem:[#allocation7 + $0x90] sm:$0xff]
    %v235 = vld [vmem:[#allocation7 + $0x98] sm:$0xff]
    %v236 = vld [vmem:[#allocation7 + $0xa0] sm:$0xff]
    %v237 = vld [vmem:[#allocation7 + $0xa8] sm:$0xff]
    %v238 = vld [vmem:[#allocation7 + $0xb0] sm:$0xff]
    %v239 = vld [vmem:[#allocation7 + $0xb8] sm:$0xff]
    %v240 = vld [vmem:[#allocation7 + $0xc0] sm:$0xff]
    %v241 = vld [vmem:[#allocation7 + $0xc8] sm:$0xff]
    %v242 = vld [vmem:[#allocation7 + $0xd0] sm:$0xff]
    %v243 = vld [vmem:[#allocation7 + $0xd8] sm:$0xff]
    %v244 = vld [vmem:[#allocation7 + $0xe0] sm:$0xff]
    %v245 = vld [vmem:[#allocation7 + $0xe8] sm:$0xff]
    %v246 = vld [vmem:[#allocation7 + $0xf0] sm:$0xff]
    %v247 = vld [vmem:[#allocation7 + $0xf8] sm:$0xff]
    %v248 = vld [vmem:[%s4] sm:$0x3]
    %v250 = vlaneseq
    %v251 = vshrl.u32 %v250, 7
    %v252 = vsub.s32 0, %v251
    %v253 = vrot.slane %v248, %v252
    %v254 = vlaneseq
    %v255 = vshrl.u32 %v254, 7
    %v256 = vsub.s32 1, %v255
    %v257 = vrot.slane %v248, %v256
    %v292 = vunpack.c.l.b16 %v216
    %v293 = vunpack.c.h.b16 %v216
    %v294 = vunpack.c.l.b16 %v217
    %v295 = vunpack.c.h.b16 %v217
    %v296 = vunpack.c.l.b16 %v218
    %v297 = vunpack.c.h.b16 %v218
    %v298 = vunpack.c.l.b16 %v219
    %v299 = vunpack.c.h.b16 %v219
    %v300 = vunpack.c.l.b16 %v220
    %v301 = vunpack.c.h.b16 %v220
    %v302 = vunpack.c.l.b16 %v221
    %v303 = vunpack.c.h.b16 %v221
    %v304 = vunpack.c.l.b16 %v222
    %v305 = vunpack.c.h.b16 %v222
    %v306 = vunpack.c.l.b16 %v223
    %v307 = vunpack.c.h.b16 %v223
    %v308 = vunpack.c.l.b16 %v224
    %v309 = vunpack.c.h.b16 %v224
    %v310 = vunpack.c.l.b16 %v225
    %v311 = vunpack.c.h.b16 %v225
    %v312 = vunpack.c.l.b16 %v226
    %v313 = vunpack.c.h.b16 %v226
    %v314 = vunpack.c.l.b16 %v227
    %v315 = vunpack.c.h.b16 %v227
    %v316 = vunpack.c.l.b16 %v228
    %v317 = vunpack.c.h.b16 %v228
    %v318 = vunpack.c.l.b16 %v229
    %v319 = vunpack.c.h.b16 %v229
    %v320 = vunpack.c.l.b16 %v230
    %v321 = vunpack.c.h.b16 %v230
    %v322 = vunpack.c.l.b16 %v231
    %v323 = vunpack.c.h.b16 %v231
    %v324 = vunpack.c.l.b16 %v232
    %v325 = vunpack.c.h.b16 %v232
    %v326 = vunpack.c.l.b16 %v233
    %v327 = vunpack.c.h.b16 %v233
    %v328 = vunpack.c.l.b16 %v234
    %v329 = vunpack.c.h.b16 %v234
    %v330 = vunpack.c.l.b16 %v235
    %v331 = vunpack.c.h.b16 %v235
    %v332 = vunpack.c.l.b16 %v236
    %v333 = vunpack.c.h.b16 %v236
    %v334 = vunpack.c.l.b16 %v237
    %v335 = vunpack.c.h.b16 %v237
    %v336 = vunpack.c.l.b16 %v238
    %v337 = vunpack.c.h.b16 %v238
    %v338 = vunpack.c.l.b16 %v239
    %v339 = vunpack.c.h.b16 %v239
    %v340 = vunpack.c.l.b16 %v240
    %v341 = vunpack.c.h.b16 %v240
    %v342 = vunpack.c.l.b16 %v241
    %v343 = vunpack.c.h.b16 %v241
    %v344 = vunpack.c.l.b16 %v242
    %v345 = vunpack.c.h.b16 %v242
    %v346 = vunpack.c.l.b16 %v243
    %v347 = vunpack.c.h.b16 %v243
    %v348 = vunpack.c.l.b16 %v244
    %v349 = vunpack.c.h.b16 %v244
    %v350 = vunpack.c.l.b16 %v245
    %v351 = vunpack.c.h.b16 %v245
    %v352 = vunpack.c.l.b16 %v246
    %v353 = vunpack.c.h.b16 %v246
    %v354 = vunpack.c.l.b16 %v247
    %v355 = vunpack.c.h.b16 %v247
    %v356 = vpack.c.b16 %v294, %v292
    %v357 = vpack.c.b16 %v295, %v293
    %v358 = vpack.c.b16 %v298, %v296
    %v359 = vpack.c.b16 %v299, %v297
    %v360 = vpack.c.b16 %v302, %v300
    %v361 = vpack.c.b16 %v303, %v301
    %v362 = vpack.c.b16 %v306, %v304
    %v363 = vpack.c.b16 %v307, %v305
    %v364 = vpack.c.b16 %v310, %v308
    %v365 = vpack.c.b16 %v311, %v309
    %v366 = vpack.c.b16 %v314, %v312
    %v367 = vpack.c.b16 %v315, %v313
    %v368 = vpack.c.b16 %v318, %v316
    %v369 = vpack.c.b16 %v319, %v317
    %v370 = vpack.c.b16 %v322, %v320
    %v371 = vpack.c.b16 %v323, %v321
    %v372 = vpack.c.b16 %v326, %v324
    %v373 = vpack.c.b16 %v327, %v325
    %v374 = vpack.c.b16 %v330, %v328
    %v375 = vpack.c.b16 %v331, %v329
    %v376 = vpack.c.b16 %v334, %v332
    %v377 = vpack.c.b16 %v335, %v333
    %v378 = vpack.c.b16 %v338, %v336
    %v379 = vpack.c.b16 %v339, %v337
    %v380 = vpack.c.b16 %v342, %v340
    %v381 = vpack.c.b16 %v343, %v341
    %v382 = vpack.c.b16 %v346, %v344
    %v383 = vpack.c.b16 %v347, %v345
    %v384 = vpack.c.b16 %v350, %v348
    %v385 = vpack.c.b16 %v351, %v349
    %v386 = vpack.c.b16 %v354, %v352
    %v387 = vpack.c.b16 %v355, %v353
    %420 = vmatprep.subr.bf16.mxu0 %v357
    %421 = vmatpush1.bf16.msra.mxu0 %v356
    %422 = vmatprep.subr.bf16.mxu0 %v359
    %423 = vmatpush1.bf16.msra.mxu0 %v358
    %424 = vmatprep.subr.bf16.mxu0 %v361
    %425 = vmatpush1.bf16.msra.mxu0 %v360
    %426 = vmatprep.subr.bf16.mxu0 %v363
    %427 = vmatpush1.bf16.msra.mxu0 %v362
    %428 = vmatprep.subr.bf16.mxu0 %v365
    %429 = vmatpush1.bf16.msra.mxu0 %v364
    %430 = vmatprep.subr.bf16.mxu0 %v367
    %431 = vmatpush1.bf16.msra.mxu0 %v366
    %432 = vmatprep.subr.bf16.mxu0 %v369
    %433 = vmatpush1.bf16.msra.mxu0 %v368
    %434 = vmatprep.subr.bf16.mxu0 %v371
    %435 = vmatpush1.bf16.msra.mxu0 %v370
    %436 = vmatprep.subr.bf16.mxu0 %v373
    %437 = vmatpush1.bf16.msra.mxu0 %v372
    %438 = vmatprep.subr.bf16.mxu0 %v375
    %439 = vmatpush1.bf16.msra.mxu0 %v374
    %440 = vmatprep.subr.bf16.mxu0 %v377
    %441 = vmatpush1.bf16.msra.mxu0 %v376
    %442 = vmatprep.subr.bf16.mxu0 %v379
    %443 = vmatpush1.bf16.msra.mxu0 %v378
    %444 = vmatprep.subr.bf16.mxu0 %v381
    %445 = vmatpush1.bf16.msra.mxu0 %v380
    %446 = vmatprep.subr.bf16.mxu0 %v383
    %447 = vmatpush1.bf16.msra.mxu0 %v382
    %448 = vmatprep.subr.bf16.mxu0 %v385
    %449 = vmatpush1.bf16.msra.mxu0 %v384
    %450 = vmatprep.subr.bf16.mxu0 %v387
    %451 = vmatpush1.bf16.msra.mxu0 %v386
    %452 = vmatprep.mubr.bf16.mxu0 %v215
    %453 = vmatmul.mubr.bf16.gmra.mrb[0].mxu0 %v214
    %v454 = vpop.f32.mrb[0].mxu0
    %v455 = vadd.f32 %v253, %v454
    %v456 = vpop.f32.mrb[0].mxu0
    %v457 = vadd.f32 %v257, %v456
    %v458 = vpop.f32.mrb[0].mxu0
    %v459 = vpop.f32.mrb[0].mxu0
    %460 = vdwg.mxu0
    %461 = vst [vmem:[#allocation8] sm:$0xff] %v455
    %462 = vst [vmem:[#allocation8 + $0x8] sm:$0xff] %v457
    // Predicated region
    $region34: #{tpu_custom_call.1} parent=1 // pred_check
      _
    $region35: #{tpu_custom_call.1} parent=1 // pred_check_branch
      %464 = sbr.rel (0) target = $region37
    $region36: #{tpu_custom_call.1} parent=1 // pred_region
      %s466 = ssub.s32 256, 256
      %467 = vsyncadd [#allocation4], %s466
      %s469 = sshll.u32 [#allocation8], 4
      %s470 = int_to_ptr.vmem [resolvable:$true] %s469
      %472 = dma.vmem_to_hbm [thread:$0]  %s470, 256, %s5, [#allocation4]
    $region37: #{tpu_custom_call.1} parent=1 // pred_fallthru
      _
    // Predicated region
    $region38: #{tpu_custom_call.1} parent=1 // pred_check
      _
    $region39: #{tpu_custom_call.1} parent=1 // pred_check_branch
      %474 = sbr.rel (0) target = $region41
    $region40: #{tpu_custom_call.1} parent=1 // pred_region
      %475 = dma.done [#allocation4], 256
    $region41: #{tpu_custom_call.1} parent=1 // pred_fallthru
      _
    %476 = vsyncpa [#allocation3], 1
    %477 = vsyncpa [#allocation6], 1
    %478 = vsyncpa [#allocation4], 1

</llo_original>
